<compile_context>
chip_gen: v6e
topology: v6e:2x2x1
jax: 0.10.0
libtpu: 0.0.40
codegen_flags: <defaults>
</compile_context>

<pallas_src>
import functools

import jax
import jax.numpy as jnp
from jax.experimental import pallas as pl
from jax.experimental.pallas import tpu as pltpu

IN_DIM = 1280
OUT_DIM = 5


def _linear_kernel(x_ref, w_ref, b_ref, o_ref):
    # x_ref: (block_m, 1280), w_ref: (1280, 5), b_ref: (1, 5), o_ref: (block_m, 5)
    acc = jnp.dot(x_ref[...], w_ref[...], preferred_element_type=jnp.float32)
    o_ref[...] = (acc + b_ref[...]).astype(o_ref.dtype)


def _round_up(x, m):
    return ((x + m - 1) // m) * m


def _pick_block_m(n_rows, itemsize):
    """Row tile sized against this chip's VMEM (double-buffered x tile)."""
    try:
        vmem_bytes = int(pltpu.get_tpu_info().vmem_capacity_bytes)
    except Exception:  # conservative fallback (assume v7x-like 64 MiB)
        vmem_bytes = 64 << 20
    # Target ~1/4 of physical VMEM for the double-buffered activation tile:
    #   v5e/v6e (128 MiB) -> 2048 rows fp32; v7x (64 MiB) -> ~1632 rows fp32.
    budget = vmem_bytes // 4
    block_m = budget // (2 * IN_DIM * itemsize)
    block_m = max(8, min(2048, (block_m // 8) * 8))
    # Never use a tile larger than the (sublane-rounded) batch itself.
    block_m = min(block_m, _round_up(max(int(n_rows), 1), 8))
    return int(block_m)


@functools.partial(jax.jit, static_argnames=("block_m", "vmem_limit_bytes"))
def _shiftpredict_pallas(x, w, b2d, *, block_m, vmem_limit_bytes):
    n = x.shape[0]
    itemsize = jnp.dtype(x.dtype).itemsize
    cost = pl.CostEstimate(
        flops=2 * n * IN_DIM * OUT_DIM,
        transcendentals=0,
        bytes_accessed=(n * IN_DIM + n * OUT_DIM) * itemsize
        + (IN_DIM * OUT_DIM + OUT_DIM) * jnp.dtype(w.dtype).itemsize,
    )
    return pl.pallas_call(
        _linear_kernel,
        out_shape=jax.ShapeDtypeStruct((n, OUT_DIM), x.dtype),
        grid_spec=pltpu.PrefetchScalarGridSpec(
            num_scalar_prefetch=0,
            grid=(pl.cdiv(n, block_m),),
            in_specs=[
                pl.BlockSpec((block_m, IN_DIM), lambda i: (i, 0)),
                pl.BlockSpec((IN_DIM, OUT_DIM), lambda i: (0, 0)),
                pl.BlockSpec((1, OUT_DIM), lambda i: (0, 0)),
            ],
            out_specs=pl.BlockSpec((block_m, OUT_DIM), lambda i: (i, 0)),
        ),
        compiler_params=pltpu.CompilerParams(
            dimension_semantics=("parallel",),
            vmem_limit_bytes=vmem_limit_bytes,
        ),
        cost_estimate=cost,
    )(x, w, b2d)


def shiftpredict_forward(svid_embed, text_embed, w, b, *, block_m=None):
    """Forward pass of Shiftpredict: Linear(1280 -> 5) on flattened svid_embed."""
    del text_embed  # unused in the active PyTorch forward path
    x = svid_embed.reshape(-1, IN_DIM)  # == torch .view(-1, 1280)
    n = x.shape[0]
    itemsize = jnp.dtype(x.dtype).itemsize
    if block_m is None:
        block_m = _pick_block_m(n, itemsize)
    # Scoped-VMEM budget: double-buffered x tile + slack for W/b/out/scratch.
    x_tile_bytes = 2 * block_m * IN_DIM * itemsize
    vmem_limit_bytes = int(x_tile_bytes + (8 << 20))
    b2d = b.reshape(1, OUT_DIM).astype(w.dtype)
    return _shiftpredict_pallas(
        x, w, b2d, block_m=int(block_m), vmem_limit_bytes=vmem_limit_bytes
    )


def init_params(key, in_dim=IN_DIM, out_dim=OUT_DIM, dtype=jnp.float32):
    # Deterministic init mimicking nn.Linear's uniform(-1/sqrt(in), 1/sqrt(in)).
    kw, kb = jax.random.split(key)
    bound = 1.0 / jnp.sqrt(jnp.asarray(in_dim, dtype=jnp.float32))
    w = jax.random.uniform(kw, (in_dim, out_dim), dtype=dtype,
                           minval=-bound, maxval=bound)
    b = jax.random.uniform(kb, (out_dim,), dtype=dtype,
                           minval=-bound, maxval=bound)
    return w, b


if __name__ == "__main__":
    key = jax.random.PRNGKey(0)
    k1, k2, k3, kp = jax.random.split(key, 4)

    w, b = init_params(kp)

    # Case 1: small batch (8 rows of 1280-d video embeddings); text embeds unused.
    svid_embed = jax.random.normal(k1, (8, 1280), dtype=jnp.float32)
    text_embed = jax.random.normal(k2, (8, 512), dtype=jnp.float32)
    out = jax.block_until_ready(shiftpredict_forward(svid_embed, text_embed, w, b))
    ref = svid_embed.reshape(-1, IN_DIM) @ w + b
    assert out.shape == (8, OUT_DIM), out.shape
    assert jnp.allclose(out, ref, atol=1e-4, rtol=1e-4)

    # Case 2: non-divisible batch with an explicit small tile to exercise the
    # masked partial last block (no input padding, no output slicing).
    svid2 = jax.random.normal(k3, (40, 1280), dtype=jnp.float32)
    out2 = jax.block_until_ready(
        shiftpredict_forward(svid2, None, w, b, block_m=16)
    )
    ref2 = svid2 @ w + b
    assert out2.shape == (40, OUT_DIM), out2.shape
    assert jnp.allclose(out2, ref2, atol=1e-4, rtol=1e-4)

    print("KERNEL_OK")
</pallas_src>

<mosaic_0001>
module attributes {stable_mosaic.version = 11 : i64} {
  func.func @_linear_kernel(%arg0: i32, %arg1: memref<8x1280xf32, #tpu.memory_space<vmem>>, %arg2: memref<1280x5xf32, #tpu.memory_space<vmem>>, %arg3: memref<1x5xf32, #tpu.memory_space<vmem>>, %arg4: memref<8x5xf32, #tpu.memory_space<vmem>>) attributes {dimension_semantics = [#tpu.dimension_semantics<parallel>], iteration_bounds = array<i64: 1>, scalar_prefetch = 0 : i64, scratch_operands = 0 : i64, tpu.core_type = #tpu.core_type<tc>, window_params = [{transform_indices = @transform_0, window_bounds = array<i64: 8, 1280>}, {pipeline_mode = #tpu.pipeline_mode<synchronous>, transform_indices = @transform_1, window_bounds = array<i64: 1280, 5>}, {pipeline_mode = #tpu.pipeline_mode<synchronous>, transform_indices = @transform_2, window_bounds = array<i64: 1, 5>}, {transform_indices = @transform_3, window_bounds = array<i64: 8, 5>}]} {
    %c0 = arith.constant 0 : index
    %c0_0 = arith.constant 0 : index
    %0 = vector.load %arg1[%c0, %c0_0] : memref<8x1280xf32, #tpu.memory_space<vmem>>, vector<8x1280xf32>
    %c0_1 = arith.constant 0 : index
    %c0_2 = arith.constant 0 : index
    %1 = vector.load %arg2[%c0_1, %c0_2] : memref<1280x5xf32, #tpu.memory_space<vmem>>, vector<1280x5xf32>
    %cst = arith.constant dense<0.000000e+00> : vector<8x5xf32>
    %2 = tpu.matmul %0, %1, %cst {dimension_numbers = #tpu.dot_dimension_numbers<[1], [0], [0], [1], [0, 0, 1, 1], [], []>} : vector<8x1280xf32>, vector<1280x5xf32>, vector<8x5xf32> -> vector<8x5xf32>
    %c0_3 = arith.constant 0 : index
    %c0_4 = arith.constant 0 : index
    %3 = vector.load %arg3[%c0_3, %c0_4] : memref<1x5xf32, #tpu.memory_space<vmem>>, vector<1x5xf32>
    %4 = vector.broadcast %3 : vector<1x5xf32> to vector<8x5xf32>
    %5 = arith.addf %2, %4 : vector<8x5xf32>
    %c0_5 = arith.constant 0 : index
    %c0_6 = arith.constant 0 : index
    %6 = vector.load %arg4[%c0_5, %c0_6] : memref<8x5xf32, #tpu.memory_space<vmem>>, vector<8x5xf32>
    tpu.vector_store %arg4[%c0_5, %c0_6], %5 {strides = array<i32>} : memref<8x5xf32, #tpu.memory_space<vmem>>, vector<8x5xf32>,
    return
  }
  func.func @transform_0(%arg0: i32) -> (i32, i32) {
    %c0_i32 = arith.constant 0 : i32
    %c0_i32_0 = arith.constant 0 : i32
    return %arg0, %c0_i32 : i32, i32
  }
  func.func @transform_1(%arg0: i32) -> (i32, i32) {
    %c0_i32 = arith.constant 0 : i32
    %c0_i32_0 = arith.constant 0 : i32
    %c0_i32_1 = arith.constant 0 : i32
    return %c0_i32, %c0_i32_0 : i32, i32
  }
  func.func @transform_2(%arg0: i32) -> (i32, i32) {
    %c0_i32 = arith.constant 0 : i32
    %c0_i32_0 = arith.constant 0 : i32
    %c0_i32_1 = arith.constant 0 : i32
    return %c0_i32, %c0_i32_0 : i32, i32
  }
  func.func @transform_3(%arg0: i32) -> (i32, i32) {
    %c0_i32 = arith.constant 0 : i32
    %c0_i32_0 = arith.constant 0 : i32
    return %arg0, %c0_i32 : i32, i32
  }
}

</mosaic_0001>

<llo_original>
// kernel: _shiftpredict_pallas.1
$region0: #{_shiftpredict_pallas.1}
  #allocation0 [shape = 'u32[]', space=smem, size = 0x4, offset = 0x4, fixed_abs, tag = 'smem constant byte address 0x4 - core index']
  #allocation1 [shape = 'u32[144,128]{1,0:T(1,128)}', space=vmem, size = 0x12000, scoped, tag = 'internal scratch']
  %s0 = inlined_call_operand.vmem [shape: f32[8,1280], index: 0, kind: input, shape index: {}]
  %s1 = inlined_call_operand.vmem [shape: f32[1280,5], index: 1, kind: input, shape index: {}]
  %s2 = inlined_call_operand.vmem [shape: f32[1,5], index: 2, kind: input, shape index: {}]
  %s3 = inlined_call_operand.hbm [shape: f32[8,5], index: 3, kind: output, shape index: {}]
  %s4 = sld [smem:[#allocation0]]
  $region22: #{_shiftpredict_pallas.1} parent=0
    _
  %s6 = ssub.s32 1, %s4
  %s7 = scalar_select 0, %s6, %s4
  $region1: #{_shiftpredict_pallas.1} parent=0
    #allocation2 [shape = 'u8[4096]{0}', space=vmem, size = 0x1000, scoped, tag = 'output window, operand 0, single buffered']
    #allocation3 [shape = 's32[1]{0}', space=sflag, size = 0x4, scoped, tag = 'scoped memory for _shiftpredict_pallas.1']
    %8 = vsyncpa [#allocation3], 0
    // Predicated region
    $region2: #{_shiftpredict_pallas.1} parent=1 // pred_check
      _
    $region3: #{_shiftpredict_pallas.1} parent=1 // pred_check_branch
      %10 = sbr.rel (0) target = $region5
    $region4: #{_shiftpredict_pallas.1} parent=1 // pred_region
      _
    $region5: #{_shiftpredict_pallas.1} parent=1 // pred_fallthru
      _
    // Predicated region
    $region6: #{_shiftpredict_pallas.1} parent=1 // pred_check
      _
    $region7: #{_shiftpredict_pallas.1} parent=1 // pred_check_branch
      %12 = sbr.rel (0) target = $region9
    $region8: #{_shiftpredict_pallas.1} parent=1 // pred_region
      _
    $region9: #{_shiftpredict_pallas.1} parent=1 // pred_fallthru
      _
    // Predicated region
    $region10: #{_shiftpredict_pallas.1} parent=1 // pred_check
      _
    $region11: #{_shiftpredict_pallas.1} parent=1 // pred_check_branch
      %14 = sbr.rel (0) target = $region13
    $region12: #{_shiftpredict_pallas.1} parent=1 // pred_region
      _
    $region13: #{_shiftpredict_pallas.1} parent=1 // pred_fallthru
      _
    %v15 = vld [vmem:[%s0] sm:$0xff]
    %v16 = vld [vmem:[%s0 + $0x8] sm:$0xff]
    %v17 = vld [vmem:[%s0 + $0x10] sm:$0xff]
    %v18 = vld [vmem:[%s0 + $0x18] sm:$0xff]
    %v19 = vld [vmem:[%s0 + $0x20] sm:$0xff]
    %v20 = vld [vmem:[%s0 + $0x28] sm:$0xff]
    %v21 = vld [vmem:[%s0 + $0x30] sm:$0xff]
    %v22 = vld [vmem:[%s0 + $0x38] sm:$0xff]
    %v23 = vld [vmem:[%s0 + $0x40] sm:$0xff]
    %v24 = vld [vmem:[%s0 + $0x48] sm:$0xff]
    %v25 = vld [vmem:[%s1] sm:$0xff]
    %v26 = vld [vmem:[%s1 + $0x8] sm:$0xff]
    %v27 = vld [vmem:[%s1 + $0x10] sm:$0xff]
    %v28 = vld [vmem:[%s1 + $0x18] sm:$0xff]
    %v29 = vld [vmem:[%s1 + $0x20] sm:$0xff]
    %v30 = vld [vmem:[%s1 + $0x28] sm:$0xff]
    %v31 = vld [vmem:[%s1 + $0x30] sm:$0xff]
    %v32 = vld [vmem:[%s1 + $0x38] sm:$0xff]
    %v33 = vld [vmem:[%s1 + $0x40] sm:$0xff]
    %v34 = vld [vmem:[%s1 + $0x48] sm:$0xff]
    %v35 = vld [vmem:[%s1 + $0x50] sm:$0xff]
    %v36 = vld [vmem:[%s1 + $0x58] sm:$0xff]
    %v37 = vld [vmem:[%s1 + $0x60] sm:$0xff]
    %v38 = vld [vmem:[%s1 + $0x68] sm:$0xff]
    %v39 = vld [vmem:[%s1 + $0x70] sm:$0xff]
    %v40 = vld [vmem:[%s1 + $0x78] sm:$0xff]
    %v41 = vld [vmem:[%s1 + $0x80] sm:$0xff]
    %v42 = vld [vmem:[%s1 + $0x88] sm:$0xff]
    %v43 = vld [vmem:[%s1 + $0x90] sm:$0xff]
    %v44 = vld [vmem:[%s1 + $0x98] sm:$0xff]
    %v45 = vld [vmem:[%s1 + $0xa0] sm:$0xff]
    %v46 = vld [vmem:[%s1 + $0xa8] sm:$0xff]
    %v47 = vld [vmem:[%s1 + $0xb0] sm:$0xff]
    %v48 = vld [vmem:[%s1 + $0xb8] sm:$0xff]
    %v49 = vld [vmem:[%s1 + $0xc0] sm:$0xff]
    %v50 = vld [vmem:[%s1 + $0xc8] sm:$0xff]
    %v51 = vld [vmem:[%s1 + $0xd0] sm:$0xff]
    %v52 = vld [vmem:[%s1 + $0xd8] sm:$0xff]
    %v53 = vld [vmem:[%s1 + $0xe0] sm:$0xff]
    %v54 = vld [vmem:[%s1 + $0xe8] sm:$0xff]
    %v55 = vld [vmem:[%s1 + $0xf0] sm:$0xff]
    %v56 = vld [vmem:[%s1 + $0xf8] sm:$0xff]
    %v57 = vld [vmem:[%s1 + $0x100] sm:$0xff]
    %v58 = vld [vmem:[%s1 + $0x108] sm:$0xff]
    %v59 = vld [vmem:[%s1 + $0x110] sm:$0xff]
    %v60 = vld [vmem:[%s1 + $0x118] sm:$0xff]
    %v61 = vld [vmem:[%s1 + $0x120] sm:$0xff]
    %v62 = vld [vmem:[%s1 + $0x128] sm:$0xff]
    %v63 = vld [vmem:[%s1 + $0x130] sm:$0xff]
    %v64 = vld [vmem:[%s1 + $0x138] sm:$0xff]
    %v65 = vld [vmem:[%s1 + $0x140] sm:$0xff]
    %v66 = vld [vmem:[%s1 + $0x148] sm:$0xff]
    %v67 = vld [vmem:[%s1 + $0x150] sm:$0xff]
    %v68 = vld [vmem:[%s1 + $0x158] sm:$0xff]
    %v69 = vld [vmem:[%s1 + $0x160] sm:$0xff]
    %v70 = vld [vmem:[%s1 + $0x168] sm:$0xff]
    %v71 = vld [vmem:[%s1 + $0x170] sm:$0xff]
    %v72 = vld [vmem:[%s1 + $0x178] sm:$0xff]
    %v73 = vld [vmem:[%s1 + $0x180] sm:$0xff]
    %v74 = vld [vmem:[%s1 + $0x188] sm:$0xff]
    %v75 = vld [vmem:[%s1 + $0x190] sm:$0xff]
    %v76 = vld [vmem:[%s1 + $0x198] sm:$0xff]
    %v77 = vld [vmem:[%s1 + $0x1a0] sm:$0xff]
    %v78 = vld [vmem:[%s1 + $0x1a8] sm:$0xff]
    %v79 = vld [vmem:[%s1 + $0x1b0] sm:$0xff]
    %v80 = vld [vmem:[%s1 + $0x1b8] sm:$0xff]
    %v81 = vld [vmem:[%s1 + $0x1c0] sm:$0xff]
    %v82 = vld [vmem:[%s1 + $0x1c8] sm:$0xff]
    %v83 = vld [vmem:[%s1 + $0x1d0] sm:$0xff]
    %v84 = vld [vmem:[%s1 + $0x1d8] sm:$0xff]
    %v85 = vld [vmem:[%s1 + $0x1e0] sm:$0xff]
    %v86 = vld [vmem:[%s1 + $0x1e8] sm:$0xff]
    %v87 = vld [vmem:[%s1 + $0x1f0] sm:$0xff]
    %v88 = vld [vmem:[%s1 + $0x1f8] sm:$0xff]
    %v89 = vld [vmem:[%s1 + $0x200] sm:$0xff]
    %v90 = vld [vmem:[%s1 + $0x208] sm:$0xff]
    %v91 = vld [vmem:[%s1 + $0x210] sm:$0xff]
    %v92 = vld [vmem:[%s1 + $0x218] sm:$0xff]
    %v93 = vld [vmem:[%s1 + $0x220] sm:$0xff]
    %v94 = vld [vmem:[%s1 + $0x228] sm:$0xff]
    %v95 = vld [vmem:[%s1 + $0x230] sm:$0xff]
    %v96 = vld [vmem:[%s1 + $0x238] sm:$0xff]
    %v97 = vld [vmem:[%s1 + $0x240] sm:$0xff]
    %v98 = vld [vmem:[%s1 + $0x248] sm:$0xff]
    %v99 = vld [vmem:[%s1 + $0x250] sm:$0xff]
    %v100 = vld [vmem:[%s1 + $0x258] sm:$0xff]
    %v101 = vld [vmem:[%s1 + $0x260] sm:$0xff]
    %v102 = vld [vmem:[%s1 + $0x268] sm:$0xff]
    %v103 = vld [vmem:[%s1 + $0x270] sm:$0xff]
    %v104 = vld [vmem:[%s1 + $0x278] sm:$0xff]
    %v105 = vld [vmem:[%s1 + $0x280] sm:$0xff]
    %v106 = vld [vmem:[%s1 + $0x288] sm:$0xff]
    %v107 = vld [vmem:[%s1 + $0x290] sm:$0xff]
    %v108 = vld [vmem:[%s1 + $0x298] sm:$0xff]
    %v109 = vld [vmem:[%s1 + $0x2a0] sm:$0xff]
    %v110 = vld [vmem:[%s1 + $0x2a8] sm:$0xff]
    %v111 = vld [vmem:[%s1 + $0x2b0] sm:$0xff]
    %v112 = vld [vmem:[%s1 + $0x2b8] sm:$0xff]
    %v113 = vld [vmem:[%s1 + $0x2c0] sm:$0xff]
    %v114 = vld [vmem:[%s1 + $0x2c8] sm:$0xff]
    %v115 = vld [vmem:[%s1 + $0x2d0] sm:$0xff]
    %v116 = vld [vmem:[%s1 + $0x2d8] sm:$0xff]
    %v117 = vld [vmem:[%s1 + $0x2e0] sm:$0xff]
    %v118 = vld [vmem:[%s1 + $0x2e8] sm:$0xff]
    %v119 = vld [vmem:[%s1 + $0x2f0] sm:$0xff]
    %v120 = vld [vmem:[%s1 + $0x2f8] sm:$0xff]
    %v121 = vld [vmem:[%s1 + $0x300] sm:$0xff]
    %v122 = vld [vmem:[%s1 + $0x308] sm:$0xff]
    %v123 = vld [vmem:[%s1 + $0x310] sm:$0xff]
    %v124 = vld [vmem:[%s1 + $0x318] sm:$0xff]
    %v125 = vld [vmem:[%s1 + $0x320] sm:$0xff]
    %v126 = vld [vmem:[%s1 + $0x328] sm:$0xff]
    %v127 = vld [vmem:[%s1 + $0x330] sm:$0xff]
    %v128 = vld [vmem:[%s1 + $0x338] sm:$0xff]
    %v129 = vld [vmem:[%s1 + $0x340] sm:$0xff]
    %v130 = vld [vmem:[%s1 + $0x348] sm:$0xff]
    %v131 = vld [vmem:[%s1 + $0x350] sm:$0xff]
    %v132 = vld [vmem:[%s1 + $0x358] sm:$0xff]
    %v133 = vld [vmem:[%s1 + $0x360] sm:$0xff]
    %v134 = vld [vmem:[%s1 + $0x368] sm:$0xff]
    %v135 = vld [vmem:[%s1 + $0x370] sm:$0xff]
    %v136 = vld [vmem:[%s1 + $0x378] sm:$0xff]
    %v137 = vld [vmem:[%s1 + $0x380] sm:$0xff]
    %v138 = vld [vmem:[%s1 + $0x388] sm:$0xff]
    %v139 = vld [vmem:[%s1 + $0x390] sm:$0xff]
    %v140 = vld [vmem:[%s1 + $0x398] sm:$0xff]
    %v141 = vld [vmem:[%s1 + $0x3a0] sm:$0xff]
    %v142 = vld [vmem:[%s1 + $0x3a8] sm:$0xff]
    %v143 = vld [vmem:[%s1 + $0x3b0] sm:$0xff]
    %v144 = vld [vmem:[%s1 + $0x3b8] sm:$0xff]
    %v145 = vld [vmem:[%s1 + $0x3c0] sm:$0xff]
    %v146 = vld [vmem:[%s1 + $0x3c8] sm:$0xff]
    %v147 = vld [vmem:[%s1 + $0x3d0] sm:$0xff]
    %v148 = vld [vmem:[%s1 + $0x3d8] sm:$0xff]
    %v149 = vld [vmem:[%s1 + $0x3e0] sm:$0xff]
    %v150 = vld [vmem:[%s1 + $0x3e8] sm:$0xff]
    %v151 = vld [vmem:[%s1 + $0x3f0] sm:$0xff]
    %v152 = vld [vmem:[%s1 + $0x3f8] sm:$0xff]
    %v153 = vld [vmem:[%s1 + $0x400] sm:$0xff]
    %v154 = vld [vmem:[%s1 + $0x408] sm:$0xff]
    %v155 = vld [vmem:[%s1 + $0x410] sm:$0xff]
    %v156 = vld [vmem:[%s1 + $0x418] sm:$0xff]
    %v157 = vld [vmem:[%s1 + $0x420] sm:$0xff]
    %v158 = vld [vmem:[%s1 + $0x428] sm:$0xff]
    %v159 = vld [vmem:[%s1 + $0x430] sm:$0xff]
    %v160 = vld [vmem:[%s1 + $0x438] sm:$0xff]
    %v161 = vld [vmem:[%s1 + $0x440] sm:$0xff]
    %v162 = vld [vmem:[%s1 + $0x448] sm:$0xff]
    %v163 = vld [vmem:[%s1 + $0x450] sm:$0xff]
    %v164 = vld [vmem:[%s1 + $0x458] sm:$0xff]
    %v165 = vld [vmem:[%s1 + $0x460] sm:$0xff]
    %v166 = vld [vmem:[%s1 + $0x468] sm:$0xff]
    %v167 = vld [vmem:[%s1 + $0x470] sm:$0xff]
    %v168 = vld [vmem:[%s1 + $0x478] sm:$0xff]
    %v169 = vld [vmem:[%s1 + $0x480] sm:$0xff]
    %v170 = vld [vmem:[%s1 + $0x488] sm:$0xff]
    %v171 = vld [vmem:[%s1 + $0x490] sm:$0xff]
    %v172 = vld [vmem:[%s1 + $0x498] sm:$0xff]
    %v173 = vld [vmem:[%s1 + $0x4a0] sm:$0xff]
    %v174 = vld [vmem:[%s1 + $0x4a8] sm:$0xff]
    %v175 = vld [vmem:[%s1 + $0x4b0] sm:$0xff]
    %v176 = vld [vmem:[%s1 + $0x4b8] sm:$0xff]
    %v177 = vld [vmem:[%s1 + $0x4c0] sm:$0xff]
    %v178 = vld [vmem:[%s1 + $0x4c8] sm:$0xff]
    %v179 = vld [vmem:[%s1 + $0x4d0] sm:$0xff]
    %v180 = vld [vmem:[%s1 + $0x4d8] sm:$0xff]
    %v181 = vld [vmem:[%s1 + $0x4e0] sm:$0xff]
    %v182 = vld [vmem:[%s1 + $0x4e8] sm:$0xff]
    %v183 = vld [vmem:[%s1 + $0x4f0] sm:$0xff]
    %v184 = vld [vmem:[%s1 + $0x4f8] sm:$0xff]
    %v185 = vld [vmem:[%s2] sm:$0x1]
    %v187 = vlaneseq
    %v188 = vshrl.u32 %v187, 7
    %v189 = vsub.s32 0, %v188
    %v190 = vrot.slane %v185, %v189
    %192 = vmatprep.subr.mxu0 0.0
    %193 = vmatpush1.msra.mxu0 %v40
    %194 = vmatprep.subr.mxu0 0.0
    %195 = vmatpush1.msra.mxu0 %v39
    %196 = vmatprep.subr.mxu0 0.0
    %197 = vmatpush1.msra.mxu0 %v38
    %198 = vmatprep.subr.mxu0 0.0
    %199 = vmatpush1.msra.mxu0 %v37
    %200 = vmatprep.subr.mxu0 0.0
    %201 = vmatpush1.msra.mxu0 %v36
    %202 = vmatprep.subr.mxu0 0.0
    %203 = vmatpush1.msra.mxu0 %v35
    %204 = vmatprep.subr.mxu0 0.0
    %205 = vmatpush1.msra.mxu0 %v34
    %206 = vmatprep.subr.mxu0 0.0
    %207 = vmatpush1.msra.mxu0 %v33
    %208 = vmatprep.subr.mxu0 0.0
    %209 = vmatpush1.msra.mxu0 %v32
    %210 = vmatprep.subr.mxu0 0.0
    %211 = vmatpush1.msra.mxu0 %v31
    %212 = vmatprep.subr.mxu0 0.0
    %213 = vmatpush1.msra.mxu0 %v30
    %214 = vmatprep.subr.mxu0 0.0
    %215 = vmatpush1.msra.mxu0 %v29
    %216 = vmatprep.subr.mxu0 0.0
    %217 = vmatpush1.msra.mxu0 %v28
    %218 = vmatprep.subr.mxu0 0.0
    %219 = vmatpush1.msra.mxu0 %v27
    %220 = vmatprep.subr.mxu0 0.0
    %221 = vmatpush1.msra.mxu0 %v26
    %222 = vmatprep.subr.mxu0 0.0
    %223 = vmatpush1.msra.mxu0 %v25
    %224 = vmatprep.subr.mxu0 0.0
    %225 = vmatpush2.msra.mxu0 %v56
    %226 = vmatprep.subr.mxu0 0.0
    %227 = vmatpush2.msra.mxu0 %v55
    %228 = vmatprep.subr.mxu0 0.0
    %229 = vmatpush2.msra.mxu0 %v54
    %230 = vmatprep.subr.mxu0 0.0
    %231 = vmatpush2.msra.mxu0 %v53
    %232 = vmatprep.subr.mxu0 0.0
    %233 = vmatpush2.msra.mxu0 %v52
    %234 = vmatprep.subr.mxu0 0.0
    %235 = vmatpush2.msra.mxu0 %v51
    %236 = vmatprep.subr.mxu0 0.0
    %237 = vmatpush2.msra.mxu0 %v50
    %238 = vmatprep.subr.mxu0 0.0
    %239 = vmatpush2.msra.mxu0 %v49
    %240 = vmatprep.subr.mxu0 0.0
    %241 = vmatpush2.msra.mxu0 %v48
    %242 = vmatprep.subr.mxu0 0.0
    %243 = vmatpush2.msra.mxu0 %v47
    %244 = vmatprep.subr.mxu0 0.0
    %245 = vmatpush2.msra.mxu0 %v46
    %246 = vmatprep.subr.mxu0 0.0
    %247 = vmatpush2.msra.mxu0 %v45
    %248 = vmatprep.subr.mxu0 0.0
    %249 = vmatpush2.msra.mxu0 %v44
    %250 = vmatprep.subr.mxu0 0.0
    %251 = vmatpush2.msra.mxu0 %v43
    %252 = vmatprep.subr.mxu0 0.0
    %253 = vmatpush2.msra.mxu0 %v42
    %254 = vmatprep.subr.mxu0 0.0
    %255 = vmatpush2.msra.mxu0 %v41
    %256 = vmatprep.mubr.f32.mxu0 %v16
    %257 = vmatmul.mubr.f32.gmra.mxu0 %v15
    %v258 = vpop.f32.mrf.mxu0
    %v259 = vadd.f32 %v190, %v258
    %v260 = vpop.f32.mrf.mxu0
    %261 = vdwg.mxu0
    %262 = vmatprep.subr.mxu0 0.0
    %263 = vmatpush1.msra.mxu0 %v72
    %264 = vmatprep.subr.mxu0 0.0
    %265 = vmatpush1.msra.mxu0 %v71
    %266 = vmatprep.subr.mxu0 0.0
    %267 = vmatpush1.msra.mxu0 %v70
    %268 = vmatprep.subr.mxu0 0.0
    %269 = vmatpush1.msra.mxu0 %v69
    %270 = vmatprep.subr.mxu0 0.0
    %271 = vmatpush1.msra.mxu0 %v68
    %272 = vmatprep.subr.mxu0 0.0
    %273 = vmatpush1.msra.mxu0 %v67
    %274 = vmatprep.subr.mxu0 0.0
    %275 = vmatpush1.msra.mxu0 %v66
    %276 = vmatprep.subr.mxu0 0.0
    %277 = vmatpush1.msra.mxu0 %v65
    %278 = vmatprep.subr.mxu0 0.0
    %279 = vmatpush1.msra.mxu0 %v64
    %280 = vmatprep.subr.mxu0 0.0
    %281 = vmatpush1.msra.mxu0 %v63
    %282 = vmatprep.subr.mxu0 0.0
    %283 = vmatpush1.msra.mxu0 %v62
    %284 = vmatprep.subr.mxu0 0.0
    %285 = vmatpush1.msra.mxu0 %v61
    %286 = vmatprep.subr.mxu0 0.0
    %287 = vmatpush1.msra.mxu0 %v60
    %288 = vmatprep.subr.mxu0 0.0
    %289 = vmatpush1.msra.mxu0 %v59
    %290 = vmatprep.subr.mxu0 0.0
    %291 = vmatpush1.msra.mxu0 %v58
    %292 = vmatprep.subr.mxu0 0.0
    %293 = vmatpush1.msra.mxu0 %v57
    %294 = vmatprep.subr.mxu0 0.0
    %295 = vmatpush2.msra.mxu0 %v88
    %296 = vmatprep.subr.mxu0 0.0
    %297 = vmatpush2.msra.mxu0 %v87
    %298 = vmatprep.subr.mxu0 0.0
    %299 = vmatpush2.msra.mxu0 %v86
    %300 = vmatprep.subr.mxu0 0.0
    %301 = vmatpush2.msra.mxu0 %v85
    %302 = vmatprep.subr.mxu0 0.0
    %303 = vmatpush2.msra.mxu0 %v84
    %304 = vmatprep.subr.mxu0 0.0
    %305 = vmatpush2.msra.mxu0 %v83
    %306 = vmatprep.subr.mxu0 0.0
    %307 = vmatpush2.msra.mxu0 %v82
    %308 = vmatprep.subr.mxu0 0.0
    %309 = vmatpush2.msra.mxu0 %v81
    %310 = vmatprep.subr.mxu0 0.0
    %311 = vmatpush2.msra.mxu0 %v80
    %312 = vmatprep.subr.mxu0 0.0
    %313 = vmatpush2.msra.mxu0 %v79
    %314 = vmatprep.subr.mxu0 0.0
    %315 = vmatpush2.msra.mxu0 %v78
    %316 = vmatprep.subr.mxu0 0.0
    %317 = vmatpush2.msra.mxu0 %v77
    %318 = vmatprep.subr.mxu0 0.0
    %319 = vmatpush2.msra.mxu0 %v76
    %320 = vmatprep.subr.mxu0 0.0
    %321 = vmatpush2.msra.mxu0 %v75
    %322 = vmatprep.subr.mxu0 0.0
    %323 = vmatpush2.msra.mxu0 %v74
    %324 = vmatprep.subr.mxu0 0.0
    %325 = vmatpush2.msra.mxu0 %v73
    %326 = vmatprep.mubr.f32.mxu0 %v18
    %327 = vmatmul.mubr.f32.gmra.mxu0 %v17
    %v328 = vpop.f32.mrf.mxu0
    %v329 = vadd.f32 %v259, %v328
    %v330 = vpop.f32.mrf.mxu0
    %331 = vdwg.mxu0
    %332 = vmatprep.subr.mxu0 0.0
    %333 = vmatpush1.msra.mxu0 %v104
    %334 = vmatprep.subr.mxu0 0.0
    %335 = vmatpush1.msra.mxu0 %v103
    %336 = vmatprep.subr.mxu0 0.0
    %337 = vmatpush1.msra.mxu0 %v102
    %338 = vmatprep.subr.mxu0 0.0
    %339 = vmatpush1.msra.mxu0 %v101
    %340 = vmatprep.subr.mxu0 0.0
    %341 = vmatpush1.msra.mxu0 %v100
    %342 = vmatprep.subr.mxu0 0.0
    %343 = vmatpush1.msra.mxu0 %v99
    %344 = vmatprep.subr.mxu0 0.0
    %345 = vmatpush1.msra.mxu0 %v98
    %346 = vmatprep.subr.mxu0 0.0
    %347 = vmatpush1.msra.mxu0 %v97
    %348 = vmatprep.subr.mxu0 0.0
    %349 = vmatpush1.msra.mxu0 %v96
    %350 = vmatprep.subr.mxu0 0.0
    %351 = vmatpush1.msra.mxu0 %v95
    %352 = vmatprep.subr.mxu0 0.0
    %353 = vmatpush1.msra.mxu0 %v94
    %354 = vmatprep.subr.mxu0 0.0
    %355 = vmatpush1.msra.mxu0 %v93
    %356 = vmatprep.subr.mxu0 0.0
    %357 = vmatpush1.msra.mxu0 %v92
    %358 = vmatprep.subr.mxu0 0.0
    %359 = vmatpush1.msra.mxu0 %v91
    %360 = vmatprep.subr.mxu0 0.0
    %361 = vmatpush1.msra.mxu0 %v90
    %362 = vmatprep.subr.mxu0 0.0
    %363 = vmatpush1.msra.mxu0 %v89
    %364 = vmatprep.subr.mxu0 0.0
    %365 = vmatpush2.msra.mxu0 %v120
    %366 = vmatprep.subr.mxu0 0.0
    %367 = vmatpush2.msra.mxu0 %v119
    %368 = vmatprep.subr.mxu0 0.0
    %369 = vmatpush2.msra.mxu0 %v118
    %370 = vmatprep.subr.mxu0 0.0
    %371 = vmatpush2.msra.mxu0 %v117
    %372 = vmatprep.subr.mxu0 0.0
    %373 = vmatpush2.msra.mxu0 %v116
    %374 = vmatprep.subr.mxu0 0.0
    %375 = vmatpush2.msra.mxu0 %v115
    %376 = vmatprep.subr.mxu0 0.0
    %377 = vmatpush2.msra.mxu0 %v114
    %378 = vmatprep.subr.mxu0 0.0
    %379 = vmatpush2.msra.mxu0 %v113
    %380 = vmatprep.subr.mxu0 0.0
    %381 = vmatpush2.msra.mxu0 %v112
    %382 = vmatprep.subr.mxu0 0.0
    %383 = vmatpush2.msra.mxu0 %v111
    %384 = vmatprep.subr.mxu0 0.0
    %385 = vmatpush2.msra.mxu0 %v110
    %386 = vmatprep.subr.mxu0 0.0
    %387 = vmatpush2.msra.mxu0 %v109
    %388 = vmatprep.subr.mxu0 0.0
    %389 = vmatpush2.msra.mxu0 %v108
    %390 = vmatprep.subr.mxu0 0.0
    %391 = vmatpush2.msra.mxu0 %v107
    %392 = vmatprep.subr.mxu0 0.0
    %393 = vmatpush2.msra.mxu0 %v106
    %394 = vmatprep.subr.mxu0 0.0
    %395 = vmatpush2.msra.mxu0 %v105
    %396 = vmatprep.mubr.f32.mxu0 %v20
    %397 = vmatmul.mubr.f32.gmra.mxu0 %v19
    %v398 = vpop.f32.mrf.mxu0
    %v399 = vadd.f32 %v329, %v398
    %v400 = vpop.f32.mrf.mxu0
    %401 = vdwg.mxu0
    %402 = vmatprep.subr.mxu0 0.0
    %403 = vmatpush1.msra.mxu0 %v136
    %404 = vmatprep.subr.mxu0 0.0
    %405 = vmatpush1.msra.mxu0 %v135
    %406 = vmatprep.subr.mxu0 0.0
    %407 = vmatpush1.msra.mxu0 %v134
    %408 = vmatprep.subr.mxu0 0.0
    %409 = vmatpush1.msra.mxu0 %v133
    %410 = vmatprep.subr.mxu0 0.0
    %411 = vmatpush1.msra.mxu0 %v132
    %412 = vmatprep.subr.mxu0 0.0
    %413 = vmatpush1.msra.mxu0 %v131
    %414 = vmatprep.subr.mxu0 0.0
    %415 = vmatpush1.msra.mxu0 %v130
    %416 = vmatprep.subr.mxu0 0.0
    %417 = vmatpush1.msra.mxu0 %v129
    %418 = vmatprep.subr.mxu0 0.0
    %419 = vmatpush1.msra.mxu0 %v128
    %420 = vmatprep.subr.mxu0 0.0
    %421 = vmatpush1.msra.mxu0 %v127
    %422 = vmatprep.subr.mxu0 0.0
    %423 = vmatpush1.msra.mxu0 %v126
    %424 = vmatprep.subr.mxu0 0.0
    %425 = vmatpush1.msra.mxu0 %v125
    %426 = vmatprep.subr.mxu0 0.0
    %427 = vmatpush1.msra.mxu0 %v124
    %428 = vmatprep.subr.mxu0 0.0
    %429 = vmatpush1.msra.mxu0 %v123
    %430 = vmatprep.subr.mxu0 0.0
    %431 = vmatpush1.msra.mxu0 %v122
    %432 = vmatprep.subr.mxu0 0.0
    %433 = vmatpush1.msra.mxu0 %v121
    %434 = vmatprep.subr.mxu0 0.0
    %435 = vmatpush2.msra.mxu0 %v152
    %436 = vmatprep.subr.mxu0 0.0
    %437 = vmatpush2.msra.mxu0 %v151
    %438 = vmatprep.subr.mxu0 0.0
    %439 = vmatpush2.msra.mxu0 %v150
    %440 = vmatprep.subr.mxu0 0.0
    %441 = vmatpush2.msra.mxu0 %v149
    %442 = vmatprep.subr.mxu0 0.0
    %443 = vmatpush2.msra.mxu0 %v148
    %444 = vmatprep.subr.mxu0 0.0
    %445 = vmatpush2.msra.mxu0 %v147
    %446 = vmatprep.subr.mxu0 0.0
    %447 = vmatpush2.msra.mxu0 %v146
    %448 = vmatprep.subr.mxu0 0.0
    %449 = vmatpush2.msra.mxu0 %v145
    %450 = vmatprep.subr.mxu0 0.0
    %451 = vmatpush2.msra.mxu0 %v144
    %452 = vmatprep.subr.mxu0 0.0
    %453 = vmatpush2.msra.mxu0 %v143
    %454 = vmatprep.subr.mxu0 0.0
    %455 = vmatpush2.msra.mxu0 %v142
    %456 = vmatprep.subr.mxu0 0.0
    %457 = vmatpush2.msra.mxu0 %v141
    %458 = vmatprep.subr.mxu0 0.0
    %459 = vmatpush2.msra.mxu0 %v140
    %460 = vmatprep.subr.mxu0 0.0
    %461 = vmatpush2.msra.mxu0 %v139
    %462 = vmatprep.subr.mxu0 0.0
    %463 = vmatpush2.msra.mxu0 %v138
    %464 = vmatprep.subr.mxu0 0.0
    %465 = vmatpush2.msra.mxu0 %v137
    %466 = vmatprep.mubr.f32.mxu0 %v22
    %467 = vmatmul.mubr.f32.gmra.mxu0 %v21
    %v468 = vpop.f32.mrf.mxu0
    %v469 = vadd.f32 %v399, %v468
    %v470 = vpop.f32.mrf.mxu0
    %471 = vdwg.mxu0
    %472 = vmatprep.subr.mxu0 0.0
    %473 = vmatpush1.msra.mxu0 %v168
    %474 = vmatprep.subr.mxu0 0.0
    %475 = vmatpush1.msra.mxu0 %v167
    %476 = vmatprep.subr.mxu0 0.0
    %477 = vmatpush1.msra.mxu0 %v166
    %478 = vmatprep.subr.mxu0 0.0
    %479 = vmatpush1.msra.mxu0 %v165
    %480 = vmatprep.subr.mxu0 0.0
    %481 = vmatpush1.msra.mxu0 %v164
    %482 = vmatprep.subr.mxu0 0.0
    %483 = vmatpush1.msra.mxu0 %v163
    %484 = vmatprep.subr.mxu0 0.0
    %485 = vmatpush1.msra.mxu0 %v162
    %486 = vmatprep.subr.mxu0 0.0
    %487 = vmatpush1.msra.mxu0 %v161
    %488 = vmatprep.subr.mxu0 0.0
    %489 = vmatpush1.msra.mxu0 %v160
    %490 = vmatprep.subr.mxu0 0.0
    %491 = vmatpush1.msra.mxu0 %v159
    %492 = vmatprep.subr.mxu0 0.0
    %493 = vmatpush1.msra.mxu0 %v158
    %494 = vmatprep.subr.mxu0 0.0
    %495 = vmatpush1.msra.mxu0 %v157
    %496 = vmatprep.subr.mxu0 0.0
    %497 = vmatpush1.msra.mxu0 %v156
    %498 = vmatprep.subr.mxu0 0.0
    %499 = vmatpush1.msra.mxu0 %v155
    %500 = vmatprep.subr.mxu0 0.0
    %501 = vmatpush1.msra.mxu0 %v154
    %502 = vmatprep.subr.mxu0 0.0
    %503 = vmatpush1.msra.mxu0 %v153
    %504 = vmatprep.subr.mxu0 0.0
    %505 = vmatpush2.msra.mxu0 %v184
    %506 = vmatprep.subr.mxu0 0.0
    %507 = vmatpush2.msra.mxu0 %v183
    %508 = vmatprep.subr.mxu0 0.0
    %509 = vmatpush2.msra.mxu0 %v182
    %510 = vmatprep.subr.mxu0 0.0
    %511 = vmatpush2.msra.mxu0 %v181
    %512 = vmatprep.subr.mxu0 0.0
    %513 = vmatpush2.msra.mxu0 %v180
    %514 = vmatprep.subr.mxu0 0.0
    %515 = vmatpush2.msra.mxu0 %v179
    %516 = vmatprep.subr.mxu0 0.0
    %517 = vmatpush2.msra.mxu0 %v178
    %518 = vmatprep.subr.mxu0 0.0
    %519 = vmatpush2.msra.mxu0 %v177
    %520 = vmatprep.subr.mxu0 0.0
    %521 = vmatpush2.msra.mxu0 %v176
    %522 = vmatprep.subr.mxu0 0.0
    %523 = vmatpush2.msra.mxu0 %v175
    %524 = vmatprep.subr.mxu0 0.0
    %525 = vmatpush2.msra.mxu0 %v174
    %526 = vmatprep.subr.mxu0 0.0
    %527 = vmatpush2.msra.mxu0 %v173
    %528 = vmatprep.subr.mxu0 0.0
    %529 = vmatpush2.msra.mxu0 %v172
    %530 = vmatprep.subr.mxu0 0.0
    %531 = vmatpush2.msra.mxu0 %v171
    %532 = vmatprep.subr.mxu0 0.0
    %533 = vmatpush2.msra.mxu0 %v170
    %534 = vmatprep.subr.mxu0 0.0
    %535 = vmatpush2.msra.mxu0 %v169
    %536 = vmatprep.mubr.f32.mxu0 %v24
    %537 = vmatmul.mubr.f32.gmra.mxu0 %v23
    %v538 = vpop.f32.mrf.mxu0
    %v539 = vadd.f32 %v469, %v538
    %v540 = vpop.f32.mrf.mxu0
    %541 = vdwg.mxu0
    %vm542 = vcmask 39936
    %543 = vst.msk [vmem:[#allocation2] sm:$0xff] %vm542, %v539
    // Predicated region
    $region14: #{_shiftpredict_pallas.1} parent=1 // pred_check
      _
    $region15: #{_shiftpredict_pallas.1} parent=1 // pred_check_branch
      %545 = sbr.rel (0) target = $region17
    $region16: #{_shiftpredict_pallas.1} parent=1 // pred_region
      %s547 = ssub.s32 128, 128
      %548 = vsyncadd [#allocation3], %s547
      %s550 = sshll.u32 [#allocation2], 4
      %s551 = int_to_ptr.vmem [resolvable:$true] %s550
      %553 = dma.vmem_to_hbm [thread:$0]  %s551, 128, %s3, [#allocation3]
    $region17: #{_shiftpredict_pallas.1} parent=1 // pred_fallthru
      _
    // Predicated region
    $region18: #{_shiftpredict_pallas.1} parent=1 // pred_check
      _
    $region19: #{_shiftpredict_pallas.1} parent=1 // pred_check_branch
      %555 = sbr.rel (0) target = $region21
    $region20: #{_shiftpredict_pallas.1} parent=1 // pred_region
      %556 = dma.done [#allocation3], 128
    $region21: #{_shiftpredict_pallas.1} parent=1 // pred_fallthru
      _
    %557 = vsyncpa [#allocation3], 1

</llo_original>
